<compile_context>
chip_gen: v6e
topology: v6e:2x2x1
jax: 0.10.0
libtpu: 0.0.40
codegen_flags: <defaults>
</compile_context>

<pallas_src>
import functools

import jax
import jax.numpy as jnp
from jax.experimental import pallas as pl
from jax.experimental.pallas import tpu as pltpu


def se_block_kernel(x_ref, w1t_ref, b1_ref, w2t_ref, b2_ref, o_ref, *, inv_hw):
    # x block: (NB, C, HW), kept in its native dtype (no whole-tile upcast).
    x = x_ref[...]

    # --- squeeze: global average pool over spatial (exact: sum * 1/HW) ---
    pooled = jnp.sum(x, axis=-1, dtype=jnp.float32) * inv_hw            # (NB, C) f32

    # --- excite: 1x1 convs == tiny dense layers, routed to the otherwise-idle MXU ---
    se1 = jnp.dot(pooled, w1t_ref[...],
                  preferred_element_type=jnp.float32) + b1_ref[...]     # (NB, mid)
    se1 = jnp.maximum(se1, 0.0)
    se2 = jnp.dot(se1, w2t_ref[...],
                  preferred_element_type=jnp.float32) + b2_ref[...]     # (NB, C)
    gate = jax.nn.sigmoid(se2)                                          # (NB, C) f32

    # --- out = x + sigmoid(se), broadcast over spatial, in the input dtype ---
    # (the (NB, C) -> (NB, C, 1) lane->sublane shuffle is tiny and once-per-block)
    o_ref[...] = x + gate.astype(x.dtype)[:, :, None]


def _vmem_budget_bytes():
    """Generation-aware scoped-VMEM target: half of physical capacity, capped at
    64 MiB (-> 64 MiB on v5e/v6e's 128 MiB VMEM, 32 MiB on v7x's 64 MiB)."""
    try:
        cap = pltpu.get_tpu_info().vmem_capacity_bytes
    except Exception:
        cap = 128 << 20  # v5e / v6e physical VMEM
    return int(min(cap // 2, 64 << 20))


def _pick_batch_block(N, C, HW, itemsize, vmem_limit):
    """Largest divisor of N whose block (double-buffered input + output) fits the
    VMEM budget while leaving >= 2 grid steps so a megacore chip can split the
    grid."""
    per_batch = C * HW * itemsize
    max_nb = max(1, (vmem_limit // 4) // max(1, per_batch))  # 4 = 2 bufs x (in + out)
    if N >= 2:
        max_nb = min(max_nb, N // 2)
    max_nb = max(1, max_nb)
    nb = 1
    for d in range(1, N + 1):
        if N % d == 0 and d <= max_nb:
            nb = d
    return nb


def se_block(x, w1, b1, w2, b2):
    """x: (N, C, H, W).  w1: (mid, C), b1: (mid,), w2: (C, mid), b2: (C,)."""
    N, C, H, W = x.shape
    mid = w1.shape[0]
    HW = H * W

    # Free, contiguous view with the spatial axis on lanes.  No wrapper-side
    # padding: padding + final slice would add two full HBM passes, which is
    # far more expensive than an occasional masked tail store when HW % 128 != 0.
    x_flat = x.reshape(N, C, HW)

    vmem_limit = _vmem_budget_bytes()
    nb = _pick_batch_block(N, C, HW, jnp.dtype(x.dtype).itemsize, vmem_limit)
    # TODO(synk): if a single batch element (C * HW) ever exceeds the per-block
    # VMEM budget (huge feature maps on v7x's 64 MiB VMEM), add a two-phase grid
    # that tiles HW: phase 0 accumulates the pooled sum into scratch, phase 1
    # applies the gate.

    # Pre-transpose weights so the kernel does plain (NB,C)@(C,mid) /
    # (NB,mid)@(mid,C) matvecs; biases as lane-dense rows.
    w1t = w1.T                                  # (C, mid)
    w2t = w2.T                                  # (mid, C)
    b1_row = b1.reshape(1, mid)
    b2_row = b2.reshape(1, C)

    kernel = functools.partial(se_block_kernel, inv_hw=1.0 / HW)

    out_flat = pl.pallas_call(
        kernel,
        out_shape=jax.ShapeDtypeStruct((N, C, HW), x.dtype),
        grid_spec=pltpu.PrefetchScalarGridSpec(
            num_scalar_prefetch=0,
            grid=(N // nb,),
            in_specs=[
                pl.BlockSpec((nb, C, HW), lambda n: (n, 0, 0)),   # x: NB batches/step
                pl.BlockSpec((C, mid), lambda n: (0, 0)),         # w1^T (resident)
                pl.BlockSpec((1, mid), lambda n: (0, 0)),         # b1 row
                pl.BlockSpec((mid, C), lambda n: (0, 0)),         # w2^T (resident)
                pl.BlockSpec((1, C), lambda n: (0, 0)),           # b2 row
            ],
            out_specs=pl.BlockSpec((nb, C, HW), lambda n: (n, 0, 0)),
        ),
        compiler_params=pltpu.CompilerParams(
            dimension_semantics=("parallel",),
            vmem_limit_bytes=vmem_limit),
    )(x_flat, w1t, b1_row, w2t, b2_row)

    return out_flat.reshape(N, C, H, W)


def se_block_ref(x, w1, b1, w2, b2):
    """Pure-JAX reference of the PyTorch forward."""
    pooled = jnp.mean(x, axis=(2, 3))                         # (N, C)
    se1 = jnp.maximum(pooled @ w1.T + b1, 0.0)                # (N, mid)
    se2 = se1 @ w2.T + b2                                     # (N, C)
    gate = jax.nn.sigmoid(se2)[:, :, None, None]
    return x + gate


if __name__ == "__main__":
    # SEBlock(in_channel=32, reduction=16) -> mid = 2
    N, C, H, W = 8, 32, 16, 16
    reduction = 16
    mid = C // reduction

    key = jax.random.PRNGKey(0)
    kx, k1, k2, k3, k4 = jax.random.split(key, 5)
    x = jax.random.normal(kx, (N, C, H, W), dtype=jnp.float32)

    # Deterministic synthetic parameters (conv 1x1 weights squeezed to 2-D).
    w1 = jax.random.normal(k1, (mid, C), dtype=jnp.float32) * 0.1   # conv1.weight (mid, C, 1, 1)
    b1 = jax.random.normal(k2, (mid,), dtype=jnp.float32) * 0.1     # conv1.bias
    w2 = jax.random.normal(k3, (C, mid), dtype=jnp.float32) * 0.1   # conv2.weight (C, mid, 1, 1)
    b2 = jax.random.normal(k4, (C,), dtype=jnp.float32) * 0.1       # conv2.bias

    out = se_block(x, w1, b1, w2, b2)
    out = jax.block_until_ready(out)

    ref = se_block_ref(x, w1, b1, w2, b2)
    assert out.shape == (N, C, H, W)
    assert jnp.allclose(out, ref, atol=1e-4, rtol=1e-4), "mismatch vs reference"

    print("KERNEL_OK")
</pallas_src>

<mosaic_0001>
module attributes {stable_mosaic.version = 11 : i64} {
  func.func @se_block_kernel(%arg0: i32, %arg1: memref<4x32x256xf32, #tpu.memory_space<vmem>>, %arg2: memref<32x2xf32, #tpu.memory_space<vmem>>, %arg3: memref<1x2xf32, #tpu.memory_space<vmem>>, %arg4: memref<2x32xf32, #tpu.memory_space<vmem>>, %arg5: memref<1x32xf32, #tpu.memory_space<vmem>>, %arg6: memref<4x32x256xf32, #tpu.memory_space<vmem>>) attributes {dimension_semantics = [#tpu.dimension_semantics<parallel>], iteration_bounds = array<i64: 2>, scalar_prefetch = 0 : i64, scratch_operands = 0 : i64, tpu.core_type = #tpu.core_type<tc>, window_params = [{transform_indices = @transform_0, window_bounds = array<i64: 4, 32, 256>}, {pipeline_mode = #tpu.pipeline_mode<synchronous>, transform_indices = @transform_1, window_bounds = array<i64: 32, 2>}, {pipeline_mode = #tpu.pipeline_mode<synchronous>, transform_indices = @transform_2, window_bounds = array<i64: 1, 2>}, {pipeline_mode = #tpu.pipeline_mode<synchronous>, transform_indices = @transform_3, window_bounds = array<i64: 2, 32>}, {pipeline_mode = #tpu.pipeline_mode<synchronous>, transform_indices = @transform_4, window_bounds = array<i64: 1, 32>}, {transform_indices = @transform_5, window_bounds = array<i64: 4, 32, 256>}]} {
    %c0 = arith.constant 0 : index
    %c0_0 = arith.constant 0 : index
    %c0_1 = arith.constant 0 : index
    %0 = vector.load %arg1[%c0, %c0_0, %c0_1] : memref<4x32x256xf32, #tpu.memory_space<vmem>>, vector<4x32x256xf32>
    %cst = arith.constant dense<0.000000e+00> : vector<4x32xf32>
    %1 = vector.multi_reduction <add>, %0, %cst [2] : vector<4x32x256xf32> to vector<4x32xf32>
    %cst_2 = arith.constant 3.906250e-03 : f32
    %2 = vector.broadcast %cst_2 : f32 to vector<4x32xf32>
    %3 = arith.mulf %1, %2 : vector<4x32xf32>
    %c0_3 = arith.constant 0 : index
    %c0_4 = arith.constant 0 : index
    %4 = vector.load %arg2[%c0_3, %c0_4] : memref<32x2xf32, #tpu.memory_space<vmem>>, vector<32x2xf32>
    %cst_5 = arith.constant dense<0.000000e+00> : vector<4x2xf32>
    %5 = tpu.matmul %3, %4, %cst_5 {dimension_numbers = #tpu.dot_dimension_numbers<[1], [0], [0], [1], [0, 0, 1, 1], [], []>} : vector<4x32xf32>, vector<32x2xf32>, vector<4x2xf32> -> vector<4x2xf32>
    %c0_6 = arith.constant 0 : index
    %c0_7 = arith.constant 0 : index
    %6 = vector.load %arg3[%c0_6, %c0_7] : memref<1x2xf32, #tpu.memory_space<vmem>>, vector<1x2xf32>
    %7 = vector.broadcast %6 : vector<1x2xf32> to vector<4x2xf32>
    %8 = arith.addf %5, %7 : vector<4x2xf32>
    %cst_8 = arith.constant 0.000000e+00 : f32
    %9 = vector.broadcast %cst_8 : f32 to vector<4x2xf32>
    %10 = arith.maximumf %8, %9 : vector<4x2xf32>
    %c0_9 = arith.constant 0 : index
    %c0_10 = arith.constant 0 : index
    %11 = vector.load %arg4[%c0_9, %c0_10] : memref<2x32xf32, #tpu.memory_space<vmem>>, vector<2x32xf32>
    %cst_11 = arith.constant dense<0.000000e+00> : vector<4x32xf32>
    %12 = tpu.matmul %10, %11, %cst_11 {dimension_numbers = #tpu.dot_dimension_numbers<[1], [0], [0], [1], [0, 0, 1, 1], [], []>} : vector<4x2xf32>, vector<2x32xf32>, vector<4x32xf32> -> vector<4x32xf32>
    %c0_12 = arith.constant 0 : index
    %c0_13 = arith.constant 0 : index
    %13 = vector.load %arg5[%c0_12, %c0_13] : memref<1x32xf32, #tpu.memory_space<vmem>>, vector<1x32xf32>
    %14 = vector.broadcast %13 : vector<1x32xf32> to vector<4x32xf32>
    %15 = arith.addf %12, %14 : vector<4x32xf32>
    %16 = arith.negf %15 : vector<4x32xf32>
    %17 = math.exp %16 : vector<4x32xf32>
    %cst_14 = arith.constant 1.000000e+00 : f32
    %18 = vector.broadcast %cst_14 : f32 to vector<4x32xf32>
    %19 = arith.addf %18, %17 : vector<4x32xf32>
    %20 = arith.divf %18, %19 : vector<4x32xf32>
    %21 = vector.shape_cast %20 : vector<4x32xf32> to vector<4x32x1xf32>
    %22 = vector.broadcast %21 : vector<4x32x1xf32> to vector<4x32x256xf32>
    %23 = arith.addf %0, %22 : vector<4x32x256xf32>
    %c0_15 = arith.constant 0 : index
    %c0_16 = arith.constant 0 : index
    %c0_17 = arith.constant 0 : index
    %24 = vector.load %arg6[%c0_15, %c0_16, %c0_17] : memref<4x32x256xf32, #tpu.memory_space<vmem>>, vector<4x32x256xf32>
    tpu.vector_store %arg6[%c0_15, %c0_16, %c0_17], %23 {strides = array<i32>} : memref<4x32x256xf32, #tpu.memory_space<vmem>>, vector<4x32x256xf32>,
    return
  }
  func.func @transform_0(%arg0: i32) -> (i32, i32, i32) {
    %c0_i32 = arith.constant 0 : i32
    %c0_i32_0 = arith.constant 0 : i32
    %c0_i32_1 = arith.constant 0 : i32
    return %arg0, %c0_i32, %c0_i32_0 : i32, i32, i32
  }
  func.func @transform_1(%arg0: i32) -> (i32, i32) {
    %c0_i32 = arith.constant 0 : i32
    %c0_i32_0 = arith.constant 0 : i32
    %c0_i32_1 = arith.constant 0 : i32
    return %c0_i32, %c0_i32_0 : i32, i32
  }
  func.func @transform_2(%arg0: i32) -> (i32, i32) {
    %c0_i32 = arith.constant 0 : i32
    %c0_i32_0 = arith.constant 0 : i32
    %c0_i32_1 = arith.constant 0 : i32
    return %c0_i32, %c0_i32_0 : i32, i32
  }
  func.func @transform_3(%arg0: i32) -> (i32, i32) {
    %c0_i32 = arith.constant 0 : i32
    %c0_i32_0 = arith.constant 0 : i32
    %c0_i32_1 = arith.constant 0 : i32
    return %c0_i32, %c0_i32_0 : i32, i32
  }
  func.func @transform_4(%arg0: i32) -> (i32, i32) {
    %c0_i32 = arith.constant 0 : i32
    %c0_i32_0 = arith.constant 0 : i32
    %c0_i32_1 = arith.constant 0 : i32
    return %c0_i32, %c0_i32_0 : i32, i32
  }
  func.func @transform_5(%arg0: i32) -> (i32, i32, i32) {
    %c0_i32 = arith.constant 0 : i32
    %c0_i32_0 = arith.constant 0 : i32
    %c0_i32_1 = arith.constant 0 : i32
    return %arg0, %c0_i32, %c0_i32_0 : i32, i32, i32
  }
}

</mosaic_0001>

<llo_original>
// kernel: tpu_custom_call.1
$region0: #{tpu_custom_call.1}
  #allocation0 [shape = 'u32[]', space=smem, size = 0x4, offset = 0x4, fixed_abs, tag = 'smem constant byte address 0x4 - core index']
  #allocation1 [shape = 'u32[144,128]{1,0:T(1,128)}', space=vmem, size = 0x12000, scoped, tag = 'internal scratch']
  %s0 = inlined_call_operand.hbm [shape: f32[8,32,256], index: 0, kind: input, shape index: {}]
  %s1 = inlined_call_operand.vmem [shape: f32[32,2], index: 1, kind: input, shape index: {}]
  %s2 = inlined_call_operand.vmem [shape: f32[1,2], index: 2, kind: input, shape index: {}]
  %s3 = inlined_call_operand.vmem [shape: f32[2,32], index: 3, kind: input, shape index: {}]
  %s4 = inlined_call_operand.vmem [shape: f32[1,32], index: 4, kind: input, shape index: {}]
  %s5 = inlined_call_operand.hbm [shape: f32[8,32,256], index: 5, kind: output, shape index: {}]
  %s6 = sld [smem:[#allocation0]]
  $region57: #{tpu_custom_call.1} parent=0
    _
  %s8 = ssub.s32 1, %s6
  %s9 = scalar_select 0, %s8, %s6
  $region1: #{tpu_custom_call.1} parent=0
    #allocation2 [shape = 'u8[262144]{0}', space=vmem, size = 0x40000, scoped, tag = 'input window, operand 0']
    #allocation3 [shape = 's32[2]{0}', space=sflag, size = 0x8, scoped, tag = 'scoped memory for tpu_custom_call.1']
    #allocation4 [shape = 's32[2]{0}', space=sflag, size = 0x8, scoped, tag = 'scoped memory for tpu_custom_call.1']
    #allocation5 [shape = 'u8[262144]{0}', space=vmem, size = 0x40000, scoped, tag = 'output window, operand 0']
    %10 = vsyncpa [#allocation3], 0
    %s11 = scalar_lea.sflag [#allocation3], 1
    %12 = vsyncpa %s11, 0
    %13 = vsyncpa [#allocation4], 0
    %s14 = scalar_lea.sflag [#allocation4], 1
    %15 = vsyncpa %s14, 0
    loop: start=0, step=1, limit=4
    $region2: #{tpu_custom_call.1} parent=1 // loop_pre_header
      _
    $region3: #{tpu_custom_call.1} parent=1 // loop_header
      %s17 = sphi 0, %s21
      %p18 = scmp.ge.s32.totalorder %s17, 4
      %s27 = sphi 0, %s29
      %s30 = sphi 0, %s27
      %s31 = sphi 0, %s30
      %s47 = sphi 0, %s31
      %s51 = sphi 0, %s51
      %s53 = sphi 0, %s51
      %s54 = sphi 0, %s53
      %s68 = sphi 0, %s54
      %s72 = sphi 0, %s72
      %s74 = sphi 0, %s72
      %s75 = sphi 0, %s74
      %s89 = sphi 0, %s75
      %s93 = sphi 0, %s93
      %s95 = sphi 0, %s93
      %s96 = sphi 0, %s95
      %s110 = sphi 0, %s96
      %s114 = sphi 0, %s114
      %s116 = sphi 0, %s114
      %s117 = sphi 0, %s116
      %s131 = sphi 0, %s117
      %s137 = sphi 0, %s139
      %s140 = sphi 0, %s137
      %s141 = sphi 0, %s140
      %s157 = sphi 0, %s141
    $region4: #{tpu_custom_call.1} parent=1 // loop_header_branch
      %20 = sbr.rel (%p18) target = $region8
    $region5: #{tpu_custom_call.1} parent=1 // loop_body
      %s22 = ssub.s32 %s17, 1
      %s23 = ssub.s32 %s17, 2
      %s24 = sadd.s32 %s17, 1
      %s25 = ssub.s32 %s17, %s24
      %p26 = scmp.eq.s32.totalorder %s25, 0
      %s28 = sadd.s32 %s27, 1
      %s29 = scalar_select %p26, %s27, %s28
      %p32 = pneg %p26
      %p33 = scmp.eq.s32.totalorder %s17, 1
      %p34 = por %p32, %p33
      %p35 = scmp.ne.s32.totalorder %s27, %s30
      %p36 = scmp.eq.s32.totalorder %s17, 0
      %p37 = por %p35, %p36
      %p38 = scmp.ne.s32.totalorder %s27, %s30
      %p39 = scmp.eq.s32.totalorder %s22, 1
      %p40 = por %p38, %p39
      %p41 = scmp.ne.s32.totalorder %s30, %s31
      %p42 = scmp.eq.s32.totalorder %s22, 0
      %p43 = por %p41, %p42
      %p44 = scmp.ne.s32.totalorder %s30, %s31
      %p45 = scmp.eq.s32.totalorder %s23, 1
      %p46 = por %p44, %p45
      %p48 = scmp.ne.s32.totalorder %s31, %s47
      %p49 = scmp.eq.s32.totalorder %s23, 0
      %p50 = por %p48, %p49
      %s52 = sadd.s32 %s51, 1
      %p55 = scmp.eq.s32.totalorder %s17, 1
      %p56 = scmp.ne.s32.totalorder %s51, %s53
      %p57 = scmp.eq.s32.totalorder %s17, 0
      %p58 = por %p56, %p57
      %p59 = scmp.ne.s32.totalorder %s51, %s53
      %p60 = scmp.eq.s32.totalorder %s22, 1
      %p61 = por %p59, %p60
      %p62 = scmp.ne.s32.totalorder %s53, %s54
      %p63 = scmp.eq.s32.totalorder %s22, 0
      %p64 = por %p62, %p63
      %p65 = scmp.ne.s32.totalorder %s53, %s54
      %p66 = scmp.eq.s32.totalorder %s23, 1
      %p67 = por %p65, %p66
      %p69 = scmp.ne.s32.totalorder %s54, %s68
      %p70 = scmp.eq.s32.totalorder %s23, 0
      %p71 = por %p69, %p70
      %s73 = sadd.s32 %s72, 1
      %p76 = scmp.eq.s32.totalorder %s17, 1
      %p77 = scmp.ne.s32.totalorder %s72, %s74
      %p78 = scmp.eq.s32.totalorder %s17, 0
      %p79 = por %p77, %p78
      %p80 = scmp.ne.s32.totalorder %s72, %s74
      %p81 = scmp.eq.s32.totalorder %s22, 1
      %p82 = por %p80, %p81
      %p83 = scmp.ne.s32.totalorder %s74, %s75
      %p84 = scmp.eq.s32.totalorder %s22, 0
      %p85 = por %p83, %p84
      %p86 = scmp.ne.s32.totalorder %s74, %s75
      %p87 = scmp.eq.s32.totalorder %s23, 1
      %p88 = por %p86, %p87
      %p90 = scmp.ne.s32.totalorder %s75, %s89
      %p91 = scmp.eq.s32.totalorder %s23, 0
      %p92 = por %p90, %p91
      %s94 = sadd.s32 %s93, 1
      %p97 = scmp.eq.s32.totalorder %s17, 1
      %p98 = scmp.ne.s32.totalorder %s93, %s95
      %p99 = scmp.eq.s32.totalorder %s17, 0
      %p100 = por %p98, %p99
      %p101 = scmp.ne.s32.totalorder %s93, %s95
      %p102 = scmp.eq.s32.totalorder %s22, 1
      %p103 = por %p101, %p102
      %p104 = scmp.ne.s32.totalorder %s95, %s96
      %p105 = scmp.eq.s32.totalorder %s22, 0
      %p106 = por %p104, %p105
      %p107 = scmp.ne.s32.totalorder %s95, %s96
      %p108 = scmp.eq.s32.totalorder %s23, 1
      %p109 = por %p107, %p108
      %p111 = scmp.ne.s32.totalorder %s96, %s110
      %p112 = scmp.eq.s32.totalorder %s23, 0
      %p113 = por %p111, %p112
      %s115 = sadd.s32 %s114, 1
      %p118 = scmp.eq.s32.totalorder %s17, 1
      %p119 = scmp.ne.s32.totalorder %s114, %s116
      %p120 = scmp.eq.s32.totalorder %s17, 0
      %p121 = por %p119, %p120
      %p122 = scmp.ne.s32.totalorder %s114, %s116
      %p123 = scmp.eq.s32.totalorder %s22, 1
      %p124 = por %p122, %p123
      %p125 = scmp.ne.s32.totalorder %s116, %s117
      %p126 = scmp.eq.s32.totalorder %s22, 0
      %p127 = por %p125, %p126
      %p128 = scmp.ne.s32.totalorder %s116, %s117
      %p129 = scmp.eq.s32.totalorder %s23, 1
      %p130 = por %p128, %p129
      %p132 = scmp.ne.s32.totalorder %s117, %s131
      %p133 = scmp.eq.s32.totalorder %s23, 0
      %p134 = por %p132, %p133
      %s135 = ssub.s32 %s17, %s24
      %p136 = scmp.eq.s32.totalorder %s135, 0
      %s138 = sadd.s32 %s137, 1
      %s139 = scalar_select %p136, %s137, %s138
      %p142 = pneg %p136
      %p143 = scmp.eq.s32.totalorder %s17, 1
      %p144 = por %p142, %p143
      %p145 = scmp.ne.s32.totalorder %s137, %s140
      %p146 = scmp.eq.s32.totalorder %s17, 0
      %p147 = por %p145, %p146
      %p148 = scmp.ne.s32.totalorder %s137, %s140
      %p149 = scmp.eq.s32.totalorder %s22, 1
      %p150 = por %p148, %p149
      %p151 = scmp.ne.s32.totalorder %s140, %s141
      %p152 = scmp.eq.s32.totalorder %s22, 0
      %p153 = por %p151, %p152
      %p154 = scmp.ne.s32.totalorder %s140, %s141
      %p155 = scmp.eq.s32.totalorder %s23, 1
      %p156 = por %p154, %p155
      %p158 = scmp.ne.s32.totalorder %s141, %s157
      %p159 = scmp.eq.s32.totalorder %s23, 0
      %p160 = por %p158, %p159
      %p161 = scmp.le.s32.totalorder 1, %s17
      %p162 = scmp.lt.s32.totalorder %s17, 3
      %p163 = pnand %p161, %p162
      %p164 = pneg %p163
      // Predicated region
      $region9: #{tpu_custom_call.1} parent=5 // pred_check
        _
      $region10: #{tpu_custom_call.1} parent=5 // pred_check_branch
        %166 = sbr.rel (%p163) target = $region12
      $region11: #{tpu_custom_call.1} parent=5 // pred_region
        %s167 = ssub.s32 %s17, 1
        // Predicated region
        $region13: #{tpu_custom_call.1} parent=11 // pred_check
          %p168 = pneg %p64
        $region14: #{tpu_custom_call.1} parent=11 // pred_check_branch
          %170 = sbr.rel (%p168) target = $region16
        $region15: #{tpu_custom_call.1} parent=11 // pred_region
          _
        $region16: #{tpu_custom_call.1} parent=11 // pred_fallthru
          _
        // Predicated region
        $region17: #{tpu_custom_call.1} parent=11 // pred_check
          %p171 = pneg %p85
        $region18: #{tpu_custom_call.1} parent=11 // pred_check_branch
          %173 = sbr.rel (%p171) target = $region20
        $region19: #{tpu_custom_call.1} parent=11 // pred_region
          _
        $region20: #{tpu_custom_call.1} parent=11 // pred_fallthru
          _
        // Predicated region
        $region21: #{tpu_custom_call.1} parent=11 // pred_check
          %p174 = pneg %p106
        $region22: #{tpu_custom_call.1} parent=11 // pred_check_branch
          %176 = sbr.rel (%p174) target = $region24
        $region23: #{tpu_custom_call.1} parent=11 // pred_region
          _
        $region24: #{tpu_custom_call.1} parent=11 // pred_fallthru
          _
        // Predicated region
        $region25: #{tpu_custom_call.1} parent=11 // pred_check
          %p177 = pneg %p127
        $region26: #{tpu_custom_call.1} parent=11 // pred_check_branch
          %179 = sbr.rel (%p177) target = $region28
        $region27: #{tpu_custom_call.1} parent=11 // pred_region
          _
        $region28: #{tpu_custom_call.1} parent=11 // pred_fallthru
          _
      $region12: #{tpu_custom_call.1} parent=5 // pred_fallthru
        _
      %p180 = scmp.lt.s32.totalorder %s17, 2
      // Predicated region
      $region29: #{tpu_custom_call.1} parent=5 // pred_check
        %p181 = pneg %p180
      $region30: #{tpu_custom_call.1} parent=5 // pred_check_branch
        %183 = sbr.rel (%p181) target = $region32
      $region31: #{tpu_custom_call.1} parent=5 // pred_region
        // Predicated region
        $region33: #{tpu_custom_call.1} parent=31 // pred_check
          %p184 = pneg %p37
        $region34: #{tpu_custom_call.1} parent=31 // pred_check_branch
          %186 = sbr.rel (%p184) target = $region36
        $region35: #{tpu_custom_call.1} parent=31 // pred_region
          %s187 = sand.u32 %s27, 1
          %s188 = scalar_lea.sflag [#allocation3], %s187
          %s189 = sand.u32 %s27, 1
          %s190 = smul.addr %s189, 256
          %s191 = scalar_lea.vmem [#allocation2], %s190
          %s192 = smul.u32 4, %s17
          %s194 = ssub.s32 4096, 4096
          %195 = vsyncadd %s188, %s194
          %s196 = smul.addr %s192, 8
          %s197 = smul.addr %s196, 128
          %s198 = scalar_lea.hbm %s0, %s197
          %s199 = sshll.u32 %s191, 4
          %s200 = int_to_ptr.vmem [resolvable:$true] %s199
          %205 = dma.hbm_to_vmem [thread:$0]  %s198, 4096, %s200, %s188, 256, 256, 16
        $region36: #{tpu_custom_call.1} parent=31 // pred_fallthru
          _
      $region32: #{tpu_custom_call.1} parent=5 // pred_fallthru
        _
      %p206 = scmp.le.s32.totalorder 1, %s17
      %p207 = scmp.lt.s32.totalorder %s17, 3
      %p208 = pnand %p206, %p207
      %p209 = pneg %p208
      // Predicated region
      $region37: #{tpu_custom_call.1} parent=5 // pred_check
        _
      $region38: #{tpu_custom_call.1} parent=5 // pred_check_branch
        %211 = sbr.rel (%p208) target = $region40
      $region39: #{tpu_custom_call.1} parent=5 // pred_region
        %s212 = ssub.s32 %s17, 1
        %s213 = sand.u32 %s30, 1
        %s214 = scalar_lea.sflag [#allocation3], %s213
        %s215 = sand.u32 %s30, 1
        %s216 = smul.addr %s215, 256
        %s217 = scalar_lea.vmem [#allocation2], %s216
        // Predicated region
        $region41: #{tpu_custom_call.1} parent=39 // pred_check
          %p218 = pneg %p43
        $region42: #{tpu_custom_call.1} parent=39 // pred_check_branch
          %220 = sbr.rel (%p218) target = $region44
        $region43: #{tpu_custom_call.1} parent=39 // pred_region
          %221 = dma.done %s214, 4096
        $region44: #{tpu_custom_call.1} parent=39 // pred_fallthru
          _
        %s222 = sand.u32 %s30, 1
        %s223 = scalar_lea.sflag [#allocation3], %s222
        %s224 = sand.u32 %s30, 1
        %s225 = smul.addr %s224, 256
        %s226 = scalar_lea.vmem [#allocation2], %s225
        %p227 = pneg %p43
        %p228 = pneg %p40
        %p229 = pneg %p64
        %p230 = pneg %p61
        %p231 = pneg %p85
        %p232 = pneg %p82
        %p233 = pneg %p106
        %p234 = pneg %p103
        %p235 = pneg %p127
        %p236 = pneg %p124
        %p237 = pneg %p153
        %p238 = pneg %p150
        %s239 = sand.u32 %s140, 1
        %s240 = scalar_lea.sflag [#allocation4], %s239
        %s241 = sand.u32 %s140, 1
        %s242 = smul.addr %s241, 256
        %s243 = scalar_lea.vmem [#allocation5], %s242
        %s244 = smul.u32 4, %s22
        %s245 = smul.u32 4, %s22
        %v246 = vld [vmem:[%s217] sm:$0xff]
        %v247 = vld [vmem:[%s217 + $0x8] sm:$0xff]
        %v248 = vld [vmem:[%s217 + $0x10] sm:$0xff]
        %v249 = vld [vmem:[%s217 + $0x18] sm:$0xff]
        %v250 = vld [vmem:[%s217 + $0x20] sm:$0xff]
        %v251 = vld [vmem:[%s217 + $0x28] sm:$0xff]
        %v252 = vld [vmem:[%s217 + $0x30] sm:$0xff]
        %v253 = vld [vmem:[%s217 + $0x38] sm:$0xff]
        %v254 = vld [vmem:[%s217 + $0x40] sm:$0xff]
        %v255 = vld [vmem:[%s217 + $0x48] sm:$0xff]
        %v256 = vld [vmem:[%s217 + $0x50] sm:$0xff]
        %v257 = vld [vmem:[%s217 + $0x58] sm:$0xff]
        %v258 = vld [vmem:[%s217 + $0x60] sm:$0xff]
        %v259 = vld [vmem:[%s217 + $0x68] sm:$0xff]
        %v260 = vld [vmem:[%s217 + $0x70] sm:$0xff]
        %v261 = vld [vmem:[%s217 + $0x78] sm:$0xff]
        %v262 = vld [vmem:[%s217 + $0x80] sm:$0xff]
        %v263 = vld [vmem:[%s217 + $0x88] sm:$0xff]
        %v264 = vld [vmem:[%s217 + $0x90] sm:$0xff]
        %v265 = vld [vmem:[%s217 + $0x98] sm:$0xff]
        %v266 = vld [vmem:[%s217 + $0xa0] sm:$0xff]
        %v267 = vld [vmem:[%s217 + $0xa8] sm:$0xff]
        %v268 = vld [vmem:[%s217 + $0xb0] sm:$0xff]
        %v269 = vld [vmem:[%s217 + $0xb8] sm:$0xff]
        %v270 = vld [vmem:[%s217 + $0xc0] sm:$0xff]
        %v271 = vld [vmem:[%s217 + $0xc8] sm:$0xff]
        %v272 = vld [vmem:[%s217 + $0xd0] sm:$0xff]
        %v273 = vld [vmem:[%s217 + $0xd8] sm:$0xff]
        %v274 = vld [vmem:[%s217 + $0xe0] sm:$0xff]
        %v275 = vld [vmem:[%s217 + $0xe8] sm:$0xff]
        %v276 = vld [vmem:[%s217 + $0xf0] sm:$0xff]
        %v277 = vld [vmem:[%s217 + $0xf8] sm:$0xff]
        %v278 = vadd.f32 %v246, %v247
        %279 = vadd.xlane.f32.xlu0 %v278
        %v280 = vpop.xlane.xlu0 %279
        %v281 = vadd.f32 %v248, %v249
        %282 = vadd.xlane.f32.xlu0 %v281
        %v283 = vpop.xlane.xlu0 %282
        %v284 = vadd.f32 %v250, %v251
        %285 = vadd.xlane.f32.xlu0 %v284
        %v286 = vpop.xlane.xlu0 %285
        %v287 = vadd.f32 %v252, %v253
        %288 = vadd.xlane.f32.xlu0 %v287
        %v289 = vpop.xlane.xlu0 %288
        %v290 = vadd.f32 %v254, %v255
        %291 = vadd.xlane.f32.xlu0 %v290
        %v292 = vpop.xlane.xlu0 %291
        %v293 = vadd.f32 %v256, %v257
        %294 = vadd.xlane.f32.xlu0 %v293
        %v295 = vpop.xlane.xlu0 %294
        %v296 = vadd.f32 %v258, %v259
        %297 = vadd.xlane.f32.xlu0 %v296
        %v298 = vpop.xlane.xlu0 %297
        %v299 = vadd.f32 %v260, %v261
        %300 = vadd.xlane.f32.xlu0 %v299
        %v301 = vpop.xlane.xlu0 %300
        %v302 = vadd.f32 %v262, %v263
        %303 = vadd.xlane.f32.xlu0 %v302
        %v304 = vpop.xlane.xlu0 %303
        %v305 = vadd.f32 %v264, %v265
        %306 = vadd.xlane.f32.xlu0 %v305
        %v307 = vpop.xlane.xlu0 %306
        %v308 = vadd.f32 %v266, %v267
        %309 = vadd.xlane.f32.xlu0 %v308
        %v310 = vpop.xlane.xlu0 %309
        %v311 = vadd.f32 %v268, %v269
        %312 = vadd.xlane.f32.xlu0 %v311
        %v313 = vpop.xlane.xlu0 %312
        %v314 = vadd.f32 %v270, %v271
        %315 = vadd.xlane.f32.xlu0 %v314
        %v316 = vpop.xlane.xlu0 %315
        %v317 = vadd.f32 %v272, %v273
        %318 = vadd.xlane.f32.xlu0 %v317
        %v319 = vpop.xlane.xlu0 %318
        %v320 = vadd.f32 %v274, %v275
        %321 = vadd.xlane.f32.xlu0 %v320
        %v322 = vpop.xlane.xlu0 %321
        %v323 = vadd.f32 %v276, %v277
        %324 = vadd.xlane.f32.xlu0 %v323
        %v325 = vpop.xlane.xlu0 %324
        %v326 = vmul.f32 %v280, 0.00390625
        %v327 = vmul.f32 %v283, 0.00390625
        %v328 = vmul.f32 %v286, 0.00390625
        %v329 = vmul.f32 %v289, 0.00390625
        %v330 = vmul.f32 %v292, 0.00390625
        %v331 = vmul.f32 %v295, 0.00390625
        %v332 = vmul.f32 %v298, 0.00390625
        %v333 = vmul.f32 %v301, 0.00390625
        %v334 = vmul.f32 %v304, 0.00390625
        %v335 = vmul.f32 %v307, 0.00390625
        %v336 = vmul.f32 %v310, 0.00390625
        %v337 = vmul.f32 %v313, 0.00390625
        %v338 = vmul.f32 %v316, 0.00390625
        %v339 = vmul.f32 %v319, 0.00390625
        %v340 = vmul.f32 %v322, 0.00390625
        %v341 = vmul.f32 %v325, 0.00390625
        %v342 = vld [vmem:[%s1] sm:$0xff]
        %v343 = vld [vmem:[%s1 + $0x8] sm:$0xff]
        %v344 = vld [vmem:[%s1 + $0x10] sm:$0xff]
        %v345 = vld [vmem:[%s1 + $0x18] sm:$0xff]
        %v346 = vld [vmem:[%s2] sm:$0x1]
        %v348 = vlaneseq
        %v349 = vshrl.u32 %v348, 7
        %v350 = vsub.s32 0, %v349
        %v351 = vrot.slane %v346, %v350
        %v369 = vlaneseq
        %v370 = vand.u32 %v369, 127
        %v371 = vlaneseq
        %v372 = vshrl.u32 %v371, 7
        %v373 = vsub.s32 %v370, %v372
        %v374 = vrot.slane %v326, %v373
        %v375 = vadd.s32 %v370, 4294967288
        %v376 = vlaneseq
        %v377 = vshrl.u32 %v376, 7
        %v378 = vsub.s32 %v375, %v377
        %v379 = vrot.slane %v327, %v378
        %vm380 = vcmask 130112
        %v381 = vsel %vm380, %v379, %v374
        %v382 = vadd.s32 %v370, 4294967280
        %v383 = vlaneseq
        %v384 = vshrl.u32 %v383, 7
        %v385 = vsub.s32 %v382, %v384
        %v386 = vrot.slane %v328, %v385
        %vm387 = vcmask 195712
        %v388 = vsel %vm387, %v386, %v381
        %v389 = vadd.s32 %v370, 4294967272
        %v390 = vlaneseq
        %v391 = vshrl.u32 %v390, 7
        %v392 = vsub.s32 %v389, %v391
        %v393 = vrot.slane %v329, %v392
        %vm394 = vcmask 261312
        %v395 = vsel %vm394, %v393, %v388
        %v396 = vlaneseq
        %v397 = vshrl.u32 %v396, 7
        %v398 = vsub.s32 %v370, %v397
        %v399 = vrot.slane %v330, %v398
        %v400 = vlaneseq
        %v401 = vshrl.u32 %v400, 7
        %v402 = vsub.s32 %v375, %v401
        %v403 = vrot.slane %v331, %v402
        %v404 = vsel %vm380, %v403, %v399
        %v405 = vlaneseq
        %v406 = vshrl.u32 %v405, 7
        %v407 = vsub.s32 %v382, %v406
        %v408 = vrot.slane %v332, %v407
        %v409 = vsel %vm387, %v408, %v404
        %v410 = vlaneseq
        %v411 = vshrl.u32 %v410, 7
        %v412 = vsub.s32 %v389, %v411
        %v413 = vrot.slane %v333, %v412
        %v414 = vsel %vm394, %v413, %v409
        %v415 = vlaneseq
        %v416 = vshrl.u32 %v415, 7
        %v417 = vsub.s32 %v370, %v416
        %v418 = vrot.slane %v334, %v417
        %v419 = vlaneseq
        %v420 = vshrl.u32 %v419, 7
        %v421 = vsub.s32 %v375, %v420
        %v422 = vrot.slane %v335, %v421
        %v423 = vsel %vm380, %v422, %v418
        %v424 = vlaneseq
        %v425 = vshrl.u32 %v424, 7
        %v426 = vsub.s32 %v382, %v425
        %v427 = vrot.slane %v336, %v426
        %v428 = vsel %vm387, %v427, %v423
        %v429 = vlaneseq
        %v430 = vshrl.u32 %v429, 7
        %v431 = vsub.s32 %v389, %v430
        %v432 = vrot.slane %v337, %v431
        %v433 = vsel %vm394, %v432, %v428
        %v434 = vlaneseq
        %v435 = vshrl.u32 %v434, 7
        %v436 = vsub.s32 %v370, %v435
        %v437 = vrot.slane %v338, %v436
        %v438 = vlaneseq
        %v439 = vshrl.u32 %v438, 7
        %v440 = vsub.s32 %v375, %v439
        %v441 = vrot.slane %v339, %v440
        %v442 = vsel %vm380, %v441, %v437
        %v443 = vlaneseq
        %v444 = vshrl.u32 %v443, 7
        %v445 = vsub.s32 %v382, %v444
        %v446 = vrot.slane %v340, %v445
        %v447 = vsel %vm387, %v446, %v442
        %v448 = vlaneseq
        %v449 = vshrl.u32 %v448, 7
        %v450 = vsub.s32 %v389, %v449
        %v451 = vrot.slane %v341, %v450
        %v452 = vsel %vm394, %v451, %v447
        %vm453 = vcmask 1041409
        %v454 = vsel %vm453, %v414, %v395
        %vm455 = vcmask 1042434
        %v456 = vsel %vm455, %v433, %v454
        %vm457 = vcmask 1043459
        %v458 = vsel %vm457, %v452, %v456
        %vm459 = vcmask 261120
        %v460 = vsel %vm459, %v458, 0
        %462 = vmatprep.subr.mxu0 0.0
        %463 = vmatpush1.msra.mxu0 0.0
        %464 = vmatprep.subr.mxu0 0.0
        %465 = vmatpush1.msra.mxu0 0.0
        %466 = vmatprep.subr.mxu0 0.0
        %467 = vmatpush1.msra.mxu0 0.0
        %468 = vmatprep.subr.mxu0 0.0
        %469 = vmatpush1.msra.mxu0 0.0
        %470 = vmatprep.subr.mxu0 0.0
        %471 = vmatpush1.msra.mxu0 0.0
        %472 = vmatprep.subr.mxu0 0.0
        %473 = vmatpush1.msra.mxu0 0.0
        %474 = vmatprep.subr.mxu0 0.0
        %475 = vmatpush1.msra.mxu0 0.0
        %476 = vmatprep.subr.mxu0 0.0
        %477 = vmatpush1.msra.mxu0 0.0
        %478 = vmatprep.subr.mxu0 0.0
        %479 = vmatpush1.msra.mxu0 0.0
        %480 = vmatprep.subr.mxu0 0.0
        %481 = vmatpush1.msra.mxu0 0.0
        %482 = vmatprep.subr.mxu0 0.0
        %483 = vmatpush1.msra.mxu0 0.0
        %484 = vmatprep.subr.mxu0 0.0
        %485 = vmatpush1.msra.mxu0 0.0
        %486 = vmatprep.subr.mxu0 0.0
        %487 = vmatpush1.msra.mxu0 %v345
        %488 = vmatprep.subr.mxu0 0.0
        %489 = vmatpush1.msra.mxu0 %v344
        %490 = vmatprep.subr.mxu0 0.0
        %491 = vmatpush1.msra.mxu0 %v343
        %492 = vmatprep.subr.mxu0 0.0
        %493 = vmatpush1.msra.mxu0 %v342
        %494 = vmatprep.subr.mxu0 0.0
        %495 = vmatpush2.msra.mxu0 0.0
        %496 = vmatprep.subr.mxu0 0.0
        %497 = vmatpush2.msra.mxu0 0.0
        %498 = vmatprep.subr.mxu0 0.0
        %499 = vmatpush2.msra.mxu0 0.0
        %500 = vmatprep.subr.mxu0 0.0
        %501 = vmatpush2.msra.mxu0 0.0
        %502 = vmatprep.subr.mxu0 0.0
        %503 = vmatpush2.msra.mxu0 0.0
        %504 = vmatprep.subr.mxu0 0.0
        %505 = vmatpush2.msra.mxu0 0.0
        %506 = vmatprep.subr.mxu0 0.0
        %507 = vmatpush2.msra.mxu0 0.0
        %508 = vmatprep.subr.mxu0 0.0
        %509 = vmatpush2.msra.mxu0 0.0
        %510 = vmatprep.subr.mxu0 0.0
        %511 = vmatpush2.msra.mxu0 0.0
        %512 = vmatprep.subr.mxu0 0.0
        %513 = vmatpush2.msra.mxu0 0.0
        %514 = vmatprep.subr.mxu0 0.0
        %515 = vmatpush2.msra.mxu0 0.0
        %516 = vmatprep.subr.mxu0 0.0
        %517 = vmatpush2.msra.mxu0 0.0
        %518 = vmatprep.subr.mxu0 0.0
        %519 = vmatpush2.msra.mxu0 0.0
        %520 = vmatprep.subr.mxu0 0.0
        %521 = vmatpush2.msra.mxu0 0.0
        %522 = vmatprep.subr.mxu0 0.0
        %523 = vmatpush2.msra.mxu0 0.0
        %524 = vmatprep.subr.mxu0 0.0
        %525 = vmatpush2.msra.mxu0 0.0
        %526 = vmatprep.mubr.f32.mxu0 0.0
        %527 = vmatmul.mubr.f32.gmra.mxu0 %v460
        %v528 = vpop.f32.mrf.mxu0
        %v529 = vadd.f32 %v351, %v528
        %v530 = vpop.f32.mrf.mxu0
        %531 = vdwg.mxu0
        %v532 = vmax.f32 %v529, 0.0
        %v533 = vld [vmem:[%s3] sm:$0x3]
        %v534 = vld [vmem:[%s4] sm:$0x1]
        %v536 = vlaneseq
        %v537 = vshrl.u32 %v536, 7
        %v538 = vsub.s32 0, %v537
        %v539 = vrot.slane %v534, %v538
        %vm541 = vcmask 15360
        %v543 = vsel %vm541, %v532, 0
        %vm545 = vcmask 1041408
        %v547 = vsel %vm545, %v533, 0
        %549 = vmatprep.subr.mxu0 0.0
        %550 = vmatpush1.msra.mxu0 0.0
        %551 = vmatprep.subr.mxu0 0.0
        %552 = vmatpush1.msra.mxu0 0.0
        %553 = vmatprep.subr.mxu0 0.0
        %554 = vmatpush1.msra.mxu0 0.0
        %555 = vmatprep.subr.mxu0 0.0
        %556 = vmatpush1.msra.mxu0 0.0
        %557 = vmatprep.subr.mxu0 0.0
        %558 = vmatpush1.msra.mxu0 0.0
        %559 = vmatprep.subr.mxu0 0.0
        %560 = vmatpush1.msra.mxu0 0.0
        %561 = vmatprep.subr.mxu0 0.0
        %562 = vmatpush1.msra.mxu0 0.0
        %563 = vmatprep.subr.mxu0 0.0
        %564 = vmatpush1.msra.mxu0 0.0
        %565 = vmatprep.subr.mxu0 0.0
        %566 = vmatpush1.msra.mxu0 0.0
        %567 = vmatprep.subr.mxu0 0.0
        %568 = vmatpush1.msra.mxu0 0.0
        %569 = vmatprep.subr.mxu0 0.0
        %570 = vmatpush1.msra.mxu0 0.0
        %571 = vmatprep.subr.mxu0 0.0
        %572 = vmatpush1.msra.mxu0 0.0
        %573 = vmatprep.subr.mxu0 0.0
        %574 = vmatpush1.msra.mxu0 0.0
        %575 = vmatprep.subr.mxu0 0.0
        %576 = vmatpush1.msra.mxu0 0.0
        %577 = vmatprep.subr.mxu0 0.0
        %578 = vmatpush1.msra.mxu0 0.0
        %579 = vmatprep.subr.mxu0 0.0
        %580 = vmatpush1.msra.mxu0 %v547
        %581 = vmatprep.subr.mxu0 0.0
        %582 = vmatpush2.msra.mxu0 0.0
        %583 = vmatprep.subr.mxu0 0.0
        %584 = vmatpush2.msra.mxu0 0.0
        %585 = vmatprep.subr.mxu0 0.0
        %586 = vmatpush2.msra.mxu0 0.0
        %587 = vmatprep.subr.mxu0 0.0
        %588 = vmatpush2.msra.mxu0 0.0
        %589 = vmatprep.subr.mxu0 0.0
        %590 = vmatpush2.msra.mxu0 0.0
        %591 = vmatprep.subr.mxu0 0.0
        %592 = vmatpush2.msra.mxu0 0.0
        %593 = vmatprep.subr.mxu0 0.0
        %594 = vmatpush2.msra.mxu0 0.0
        %595 = vmatprep.subr.mxu0 0.0
        %596 = vmatpush2.msra.mxu0 0.0
        %597 = vmatprep.subr.mxu0 0.0
        %598 = vmatpush2.msra.mxu0 0.0
        %599 = vmatprep.subr.mxu0 0.0
        %600 = vmatpush2.msra.mxu0 0.0
        %601 = vmatprep.subr.mxu0 0.0
        %602 = vmatpush2.msra.mxu0 0.0
        %603 = vmatprep.subr.mxu0 0.0
        %604 = vmatpush2.msra.mxu0 0.0
        %605 = vmatprep.subr.mxu0 0.0
        %606 = vmatpush2.msra.mxu0 0.0
        %607 = vmatprep.subr.mxu0 0.0
        %608 = vmatpush2.msra.mxu0 0.0
        %609 = vmatprep.subr.mxu0 0.0
        %610 = vmatpush2.msra.mxu0 0.0
        %611 = vmatprep.subr.mxu0 0.0
        %612 = vmatpush2.msra.mxu0 0.0
        %613 = vmatprep.mubr.f32.mxu0 0.0
        %614 = vmatmul.mubr.f32.gmra.mxu0 %v543
        %v615 = vpop.f32.mrf.mxu0
        %v616 = vadd.f32 %v539, %v615
        %v617 = vpop.f32.mrf.mxu0
        %618 = vdwg.mxu0
        %v619 = vxor.u32 %v616, 2147483648
        %v620 = vmul.f32 %v619, 1.442695
        %v621 = vpow.pop %v620
        %v622 = vadd.f32 %v621, 1.0
        %v623 = vrcp.pop %v622
        %v624 = vmul.f32 1.0, %v623
        %v625 = vlaneseq
        %v626 = vshrl.u32 %v625, 7
        %v627 = vsub.s32 0, %v626
        %v628 = vrot.slane %v624, %v627
        %630 = vbcast.lane.b32.xlu0 %v628, 256
        %v631 = vpop.permute.xlu0 %630
        %s633 = sor.u32 256, 8
        %634 = vbcast.lane.b32.xlu0 %v628, %s633
        %v635 = vpop.permute.xlu0 %634
        %s637 = sor.u32 256, 16
        %638 = vbcast.lane.b32.xlu0 %v628, %s637
        %v639 = vpop.permute.xlu0 %638
        %s641 = sor.u32 256, 24
        %642 = vbcast.lane.b32.xlu0 %v628, %s641
        %v643 = vpop.permute.xlu0 %642
        %v644 = vlaneseq
        %v645 = vshrl.u32 %v644, 7
        %v646 = vsub.s32 1, %v645
        %v647 = vrot.slane %v624, %v646
        %649 = vbcast.lane.b32.xlu0 %v647, 256
        %v650 = vpop.permute.xlu0 %649
        %s652 = sor.u32 256, 8
        %653 = vbcast.lane.b32.xlu0 %v647, %s652
        %v654 = vpop.permute.xlu0 %653
        %s656 = sor.u32 256, 16
        %657 = vbcast.lane.b32.xlu0 %v647, %s656
        %v658 = vpop.permute.xlu0 %657
        %s660 = sor.u32 256, 24
        %661 = vbcast.lane.b32.xlu0 %v647, %s660
        %v662 = vpop.permute.xlu0 %661
        %v663 = vlaneseq
        %v664 = vshrl.u32 %v663, 7
        %v665 = vsub.s32 2, %v664
        %v666 = vrot.slane %v624, %v665
        %668 = vbcast.lane.b32.xlu0 %v666, 256
        %v669 = vpop.permute.xlu0 %668
        %s671 = sor.u32 256, 8
        %672 = vbcast.lane.b32.xlu0 %v666, %s671
        %v673 = vpop.permute.xlu0 %672
        %s675 = sor.u32 256, 16
        %676 = vbcast.lane.b32.xlu0 %v666, %s675
        %v677 = vpop.permute.xlu0 %676
        %s679 = sor.u32 256, 24
        %680 = vbcast.lane.b32.xlu0 %v666, %s679
        %v681 = vpop.permute.xlu0 %680
        %v682 = vlaneseq
        %v683 = vshrl.u32 %v682, 7
        %v684 = vsub.s32 3, %v683
        %v685 = vrot.slane %v624, %v684
        %687 = vbcast.lane.b32.xlu0 %v685, 256
        %v688 = vpop.permute.xlu0 %687
        %s690 = sor.u32 256, 8
        %691 = vbcast.lane.b32.xlu0 %v685, %s690
        %v692 = vpop.permute.xlu0 %691
        %s694 = sor.u32 256, 16
        %695 = vbcast.lane.b32.xlu0 %v685, %s694
        %v696 = vpop.permute.xlu0 %695
        %s698 = sor.u32 256, 24
        %699 = vbcast.lane.b32.xlu0 %v685, %s698
        %v700 = vpop.permute.xlu0 %699
        %v701 = vadd.f32 %v246, %v631
        %v702 = vadd.f32 %v247, %v631
        %v703 = vadd.f32 %v248, %v635
        %v704 = vadd.f32 %v249, %v635
        %v705 = vadd.f32 %v250, %v639
        %v706 = vadd.f32 %v251, %v639
        %v707 = vadd.f32 %v252, %v643
        %v708 = vadd.f32 %v253, %v643
        %v709 = vadd.f32 %v254, %v650
        %v710 = vadd.f32 %v255, %v650
        %v711 = vadd.f32 %v256, %v654
        %v712 = vadd.f32 %v257, %v654
        %v713 = vadd.f32 %v258, %v658
        %v714 = vadd.f32 %v259, %v658
        %v715 = vadd.f32 %v260, %v662
        %v716 = vadd.f32 %v261, %v662
        %v717 = vadd.f32 %v262, %v669
        %v718 = vadd.f32 %v263, %v669
        %v719 = vadd.f32 %v264, %v673
        %v720 = vadd.f32 %v265, %v673
        %v721 = vadd.f32 %v266, %v677
        %v722 = vadd.f32 %v267, %v677
        %v723 = vadd.f32 %v268, %v681
        %v724 = vadd.f32 %v269, %v681
        %v725 = vadd.f32 %v270, %v688
        %v726 = vadd.f32 %v271, %v688
        %v727 = vadd.f32 %v272, %v692
        %v728 = vadd.f32 %v273, %v692
        %v729 = vadd.f32 %v274, %v696
        %v730 = vadd.f32 %v275, %v696
        %v731 = vadd.f32 %v276, %v700
        %v732 = vadd.f32 %v277, %v700
        %733 = vst [vmem:[%s243] sm:$0xff] %v701
        %734 = vst [vmem:[%s243 + $0x8] sm:$0xff] %v702
        %735 = vst [vmem:[%s243 + $0x10] sm:$0xff] %v703
        %736 = vst [vmem:[%s243 + $0x18] sm:$0xff] %v704
        %737 = vst [vmem:[%s243 + $0x20] sm:$0xff] %v705
        %738 = vst [vmem:[%s243 + $0x28] sm:$0xff] %v706
        %739 = vst [vmem:[%s243 + $0x30] sm:$0xff] %v707
        %740 = vst [vmem:[%s243 + $0x38] sm:$0xff] %v708
        %741 = vst [vmem:[%s243 + $0x40] sm:$0xff] %v709
        %742 = vst [vmem:[%s243 + $0x48] sm:$0xff] %v710
        %743 = vst [vmem:[%s243 + $0x50] sm:$0xff] %v711
        %744 = vst [vmem:[%s243 + $0x58] sm:$0xff] %v712
        %745 = vst [vmem:[%s243 + $0x60] sm:$0xff] %v713
        %746 = vst [vmem:[%s243 + $0x68] sm:$0xff] %v714
        %747 = vst [vmem:[%s243 + $0x70] sm:$0xff] %v715
        %748 = vst [vmem:[%s243 + $0x78] sm:$0xff] %v716
        %749 = vst [vmem:[%s243 + $0x80] sm:$0xff] %v717
        %750 = vst [vmem:[%s243 + $0x88] sm:$0xff] %v718
        %751 = vst [vmem:[%s243 + $0x90] sm:$0xff] %v719
        %752 = vst [vmem:[%s243 + $0x98] sm:$0xff] %v720
        %753 = vst [vmem:[%s243 + $0xa0] sm:$0xff] %v721
        %754 = vst [vmem:[%s243 + $0xa8] sm:$0xff] %v722
        %755 = vst [vmem:[%s243 + $0xb0] sm:$0xff] %v723
        %756 = vst [vmem:[%s243 + $0xb8] sm:$0xff] %v724
        %757 = vst [vmem:[%s243 + $0xc0] sm:$0xff] %v725
        %758 = vst [vmem:[%s243 + $0xc8] sm:$0xff] %v726
        %759 = vst [vmem:[%s243 + $0xd0] sm:$0xff] %v727
        %760 = vst [vmem:[%s243 + $0xd8] sm:$0xff] %v728
        %761 = vst [vmem:[%s243 + $0xe0] sm:$0xff] %v729
        %762 = vst [vmem:[%s243 + $0xe8] sm:$0xff] %v730
        %763 = vst [vmem:[%s243 + $0xf0] sm:$0xff] %v731
        %764 = vst [vmem:[%s243 + $0xf8] sm:$0xff] %v732
        %s765 = sand.u32 %s140, 1
        %s766 = scalar_lea.sflag [#allocation4], %s765
        %s767 = sand.u32 %s140, 1
        %s768 = smul.addr %s767, 256
        %s769 = scalar_lea.vmem [#allocation5], %s768
        // Predicated region
        $region45: #{tpu_custom_call.1} parent=39 // pred_check
          %p770 = pneg %p150
        $region46: #{tpu_custom_call.1} parent=39 // pred_check_branch
          %772 = sbr.rel (%p770) target = $region48
        $region47: #{tpu_custom_call.1} parent=39 // pred_region
          %s773 = smul.u32 4, %s22
          %s775 = ssub.s32 4096, 4096
          %776 = vsyncadd %s766, %s775
          %s777 = smul.addr %s773, 8
          %s778 = smul.addr %s777, 128
          %s779 = scalar_lea.hbm %s5, %s778
          %s780 = sshll.u32 %s769, 4
          %s781 = int_to_ptr.vmem [resolvable:$true] %s780
          %786 = dma.vmem_to_hbm [thread:$0]  %s781, 4096, %s779, %s766, 256, 256, 16
        $region48: #{tpu_custom_call.1} parent=39 // pred_fallthru
          _
      $region40: #{tpu_custom_call.1} parent=5 // pred_fallthru
        _
      %p787 = scmp.le.s32.totalorder 2, %s17
      // Predicated region
      $region49: #{tpu_custom_call.1} parent=5 // pred_check
        %p788 = pneg %p787
      $region50: #{tpu_custom_call.1} parent=5 // pred_check_branch
        %790 = sbr.rel (%p788) target = $region52
      $region51: #{tpu_custom_call.1} parent=5 // pred_region
        %s791 = ssub.s32 %s17, 2
        // Predicated region
        $region53: #{tpu_custom_call.1} parent=51 // pred_check
          %p792 = pneg %p156
        $region54: #{tpu_custom_call.1} parent=51 // pred_check_branch
          %794 = sbr.rel (%p792) target = $region56
        $region55: #{tpu_custom_call.1} parent=51 // pred_region
          %s795 = sand.u32 %s141, 1
          %s796 = scalar_lea.sflag [#allocation4], %s795
          %s797 = sand.u32 %s141, 1
          %s798 = smul.addr %s797, 256
          %s799 = scalar_lea.vmem [#allocation5], %s798
          %800 = dma.done %s796, 4096
        $region56: #{tpu_custom_call.1} parent=51 // pred_fallthru
          _
      $region52: #{tpu_custom_call.1} parent=5 // pred_fallthru
        _
    $region6: #{tpu_custom_call.1} parent=1 // loop_footer
      %s21 = sadd.s32 1, %s17
    $region7: #{tpu_custom_call.1} parent=1 // loop_footer_branch
      %16 = sbr.rel target = $region3
    $region8: #{tpu_custom_call.1} parent=1 // loop_exit
      _
    %801 = vsyncpa [#allocation3], 1
    %s802 = scalar_lea.sflag [#allocation3], 1
    %803 = vsyncpa %s802, 1
    %804 = vsyncpa [#allocation4], 1
    %s805 = scalar_lea.sflag [#allocation4], 1
    %806 = vsyncpa %s805, 1

</llo_original>
